<compile_context>
chip_gen: v6e
topology: v6e:2x2x1
jax: 0.10.0
libtpu: 0.0.40
codegen_flags: <defaults>
</compile_context>

<pallas_src>
import jax
import jax.numpy as jnp
import numpy as np
from jax.experimental import pallas as pl
from jax.experimental.pallas import tpu as pltpu


def _copy_kernel(x_ref, o_ref):
    # Straight 2D block copy: matching lane-dense block shapes, no reshape,
    # no relayout — full-width unmasked loads/stores.
    o_ref[...] = x_ref[...]


def unflatten(x, filter_size, *, tb=None):
    """Reshape (B, 6*filter_size*16) -> (B, 6*filter_size, 4, 4).

    The Pallas kernel performs a lane-dense identity copy (kept only as a
    fusion anchor); the 4D view itself is a free metadata reshape in JAX.
    """
    B = x.shape[0]
    C = 6 * filter_size
    F = C * 16  # lane-dense trailing dim, multiple of 128 when filter_size%... (384 for fs=4)
    assert x.shape == (B, F), f"expected shape {(B, F)}, got {x.shape}"

    itemsize = jnp.dtype(x.dtype).itemsize

    if tb is None:
        # Sublane granularity: 8 rows for f32, 16 for bf16, 32 for int8.
        sub = max(1, 32 // (8 * itemsize) * (itemsize and 1)) if False else (32 // itemsize)
        sub = max(1, sub)
        # VMEM budget ~8 MiB total for the double-buffered in+out blocks:
        #   bytes ~= 2 bufs * (in + out) * tb * F * itemsize
        # Conservative enough for v5e's 16 MiB and v7x's 32 MiB scoped defaults.
        cap = ((8 << 20) // (4 * F * itemsize)) // sub * sub
        cap = max(sub, cap)
        tb = min(B, cap)
    tb = max(1, min(tb, B))

    grid = (pl.cdiv(B, tb),)

    y2d = pl.pallas_call(
        _copy_kernel,
        out_shape=jax.ShapeDtypeStruct((B, F), x.dtype),
        grid=grid,
        in_specs=[pl.BlockSpec((tb, F), lambda i: (i, 0))],
        out_specs=pl.BlockSpec((tb, F), lambda i: (i, 0)),
        # Output reuses the input buffer (same byte size/layout): no second
        # HBM tensor, halves traffic when the input is dead after the call.
        input_output_aliases={0: 0},
        # Batch axis is embarrassingly parallel -> shard across v7x's 2 TCs;
        # harmless on single-TC v5e/v6e.
        compiler_params=pltpu.CompilerParams(
            dimension_semantics=("parallel",)),
    )(x)

    # Free metadata-only reshape (row-major, identical to torch .view()).
    return y2d.reshape(B, C, 4, 4)


if __name__ == "__main__":
    filter_size = 4                      # -> 6 * 4 = 24 output channels
    B = 2
    C = 6 * filter_size
    key = jax.random.PRNGKey(0)
    x = jax.random.normal(key, (B, C * 4 * 4), dtype=jnp.float32)  # (2, 384)

    # Host-side reference snapshot taken before the (aliased) kernel call.
    x_host = np.asarray(jax.device_get(x))

    y = unflatten(x, filter_size)
    y = jax.block_until_ready(y)

    y_ref = x_host.reshape(B, C, 4, 4)
    assert y.shape == (B, C, 4, 4), y.shape
    assert y.dtype == x.dtype
    assert np.array_equal(np.asarray(y), y_ref), "Pallas UnFlatten mismatch vs reference reshape"

    print("KERNEL_OK")
</pallas_src>

<mosaic_0001>
module attributes {stable_mosaic.version = 11 : i64} {
  func.func @_copy_kernel(%arg0: i32, %arg1: memref<2x384xf32, #tpu.memory_space<vmem>>, %arg2: memref<2x384xf32, #tpu.memory_space<vmem>>) attributes {dimension_semantics = [#tpu.dimension_semantics<parallel>], iteration_bounds = array<i64: 1>, scalar_prefetch = 0 : i64, scratch_operands = 0 : i64, tpu.core_type = #tpu.core_type<tc>, window_params = [{transform_indices = @transform_0, window_bounds = array<i64: 2, 384>}, {transform_indices = @transform_1, window_bounds = array<i64: 2, 384>}]} {
    %c0 = arith.constant 0 : index
    %c0_0 = arith.constant 0 : index
    %0 = vector.load %arg1[%c0, %c0_0] : memref<2x384xf32, #tpu.memory_space<vmem>>, vector<2x384xf32>
    %c0_1 = arith.constant 0 : index
    %c0_2 = arith.constant 0 : index
    %1 = vector.load %arg2[%c0_1, %c0_2] : memref<2x384xf32, #tpu.memory_space<vmem>>, vector<2x384xf32>
    tpu.vector_store %arg2[%c0_1, %c0_2], %0 {strides = array<i32>} : memref<2x384xf32, #tpu.memory_space<vmem>>, vector<2x384xf32>,
    return
  }
  func.func @transform_0(%arg0: i32) -> (i32, i32) {
    %c0_i32 = arith.constant 0 : i32
    %c0_i32_0 = arith.constant 0 : i32
    return %arg0, %c0_i32 : i32, i32
  }
  func.func @transform_1(%arg0: i32) -> (i32, i32) {
    %c0_i32 = arith.constant 0 : i32
    %c0_i32_0 = arith.constant 0 : i32
    return %arg0, %c0_i32 : i32, i32
  }
}

</mosaic_0001>

<llo_original>
// kernel: tpu_custom_call.1
$region0: #{tpu_custom_call.1}
  #allocation0 [shape = 'u32[]', space=smem, size = 0x4, offset = 0x4, fixed_abs, tag = 'smem constant byte address 0x4 - core index']
  #allocation1 [shape = 'u32[144,128]{1,0:T(1,128)}', space=vmem, size = 0x12000, scoped, tag = 'internal scratch']
  %s0 = inlined_call_operand.hbm [shape: f32[2,384], index: 0, kind: input, shape index: {}, may-alias: {0,1}]
  %s1 = inlined_call_operand.hbm [shape: f32[2,384], index: 1, kind: output, shape index: {}, may-alias: {0,1}]
  %s2 = sld [smem:[#allocation0]]
  $region18: #{tpu_custom_call.1} parent=0
    _
  %s4 = ssub.s32 1, %s2
  %s5 = scalar_select 0, %s4, %s2
  $region1: #{tpu_custom_call.1} parent=0
    #allocation2 [shape = 'u8[3072]{0}', space=vmem, size = 0xc00, scoped, tag = 'input window, operand 0, single buffered']
    #allocation3 [shape = 's32[1]{0}', space=sflag, size = 0x4, scoped, tag = 'scoped memory for tpu_custom_call.1']
    #allocation4 [shape = 's32[1]{0}', space=sflag, size = 0x4, scoped, tag = 'scoped memory for tpu_custom_call.1']
    #allocation5 [shape = 'u8[3072]{0}', space=vmem, size = 0xc00, scoped, tag = 'output window, operand 0, single buffered']
    %6 = vsyncpa [#allocation3], 0
    %7 = vsyncpa [#allocation4], 0
    // Predicated region
    $region2: #{tpu_custom_call.1} parent=1 // pred_check
      _
    $region3: #{tpu_custom_call.1} parent=1 // pred_check_branch
      %9 = sbr.rel (0) target = $region5
    $region4: #{tpu_custom_call.1} parent=1 // pred_region
      %s11 = ssub.s32 96, 96
      %12 = vsyncadd [#allocation3], %s11
      %s14 = sshll.u32 [#allocation2], 4
      %s15 = int_to_ptr.vmem [resolvable:$true] %s14
      %17 = dma.hbm_to_vmem [thread:$0]  %s0, 96, %s15, [#allocation3]
    $region5: #{tpu_custom_call.1} parent=1 // pred_fallthru
      _
    // Predicated region
    $region6: #{tpu_custom_call.1} parent=1 // pred_check
      _
    $region7: #{tpu_custom_call.1} parent=1 // pred_check_branch
      %19 = sbr.rel (0) target = $region9
    $region8: #{tpu_custom_call.1} parent=1 // pred_region
      %20 = dma.done [#allocation3], 96
    $region9: #{tpu_custom_call.1} parent=1 // pred_fallthru
      _
    %v21 = vld [vmem:[#allocation2] sm:$0x3f]
    %22 = vst [vmem:[#allocation5] sm:$0x3f] %v21
    // Predicated region
    $region10: #{tpu_custom_call.1} parent=1 // pred_check
      _
    $region11: #{tpu_custom_call.1} parent=1 // pred_check_branch
      %24 = sbr.rel (0) target = $region13
    $region12: #{tpu_custom_call.1} parent=1 // pred_region
      %s26 = ssub.s32 96, 96
      %27 = vsyncadd [#allocation4], %s26
      %s29 = sshll.u32 [#allocation5], 4
      %s30 = int_to_ptr.vmem [resolvable:$true] %s29
      %32 = dma.vmem_to_hbm [thread:$0]  %s30, 96, %s1, [#allocation4]
    $region13: #{tpu_custom_call.1} parent=1 // pred_fallthru
      _
    // Predicated region
    $region14: #{tpu_custom_call.1} parent=1 // pred_check
      _
    $region15: #{tpu_custom_call.1} parent=1 // pred_check_branch
      %34 = sbr.rel (0) target = $region17
    $region16: #{tpu_custom_call.1} parent=1 // pred_region
      %35 = dma.done [#allocation4], 96
    $region17: #{tpu_custom_call.1} parent=1 // pred_fallthru
      _
    %36 = vsyncpa [#allocation3], 1
    %37 = vsyncpa [#allocation4], 1

</llo_original>
